<compile_context>
chip_gen: v7x
topology: tpu7x:2x2x1
jax: 0.10.0
libtpu: 0.0.40
codegen_flags: <defaults>
</compile_context>

<pallas_src>
import functools

import jax
import jax.numpy as jnp
from jax.experimental import pallas as pl
from jax.experimental.pallas import tpu as pltpu

EPS = 1e-6


def _round_up(n: int, m: int) -> int:
    return ((n + m - 1) // m) * m


def _make_kernel(d_true: int, d_pad: int, eps: float):
    need_mask = d_pad != d_true
    inv_d = 1.0 / d_true
    inv_dm1 = 1.0 / max(d_true - 1, 1)  # unbiased std (torch.Tensor.std default)

    def kernel(x_ref, w_ref, bias_ref, gamma_ref, beta_ref, o_ref):
        # x_ref:     (TM, Dp) block of tokens (rows) x padded feature dim (lanes)
        # w_ref:     (Dp, Dp) sub-layer weight (bf16), resident across the grid
        # bias_ref:  (1, Dp)  sub-layer bias
        # gamma_ref: (1, Dp)  LayerNorm a_2
        # beta_ref:  (1, Dp)  LayerNorm b_2
        x = x_ref[...]
        w = w_ref[...]

        # sub_layer(x): MXU matmul in the weight's (low-precision) dtype,
        # f32 accumulation.  Padded lanes/rows of x and W are zero, so the
        # padded columns of `sub` stay exactly zero.
        sub = jnp.dot(x.astype(w.dtype), w, preferred_element_type=jnp.float32)
        sub = sub + bias_ref[...].astype(jnp.float32)

        # Residual in f32.
        y = x.astype(jnp.float32) + sub

        # LayerNorm over the true feature dim (padded lanes of y are zero, so
        # the row sum is unaffected; only the variance term needs masking).
        mean = jnp.sum(y, axis=-1, keepdims=True) * inv_d
        centered = y - mean
        if need_mask:
            lane = jax.lax.broadcasted_iota(jnp.int32, y.shape, dimension=1)
            cm = jnp.where(lane < d_true, centered, 0.0)
        else:
            cm = centered
        var = jnp.sum(cm * cm, axis=-1, keepdims=True) * inv_dm1
        std = jnp.sqrt(var)

        inv = pl.reciprocal(std + eps, approx=True)  # EUP slot; multiply instead of divide
        out = (gamma_ref[...].astype(jnp.float32) * centered * inv
               + beta_ref[...].astype(jnp.float32))
        o_ref[...] = out.astype(o_ref.dtype)

    return kernel


def sublayer_connection(x, w, bias, gamma, beta, *, tile_rows=256,
                        matmul_dtype=jnp.bfloat16, eps=EPS):
    """x: (B, S, D). Returns dropout(LayerNorm(x + x @ w + bias)) in eval mode."""
    B, S, D = x.shape
    rows = B * S

    # Lane-dense feature dim: pad D up to a multiple of 128.
    d_pad = _round_up(D, 128)

    # Row tile: multiple of 16 (covers f32/bf16 sublane packing), capped to data.
    tile = _round_up(max(int(tile_rows), 16), 16)
    tile = min(tile, _round_up(rows, 16))
    rows_pad = _round_up(rows, tile)

    x2 = x.reshape(rows, D)
    if rows_pad != rows or d_pad != D:
        x2 = jnp.pad(x2, ((0, rows_pad - rows), (0, d_pad - D)))

    def pad_vec(v):
        v = v.reshape(1, D)
        if d_pad != D:
            v = jnp.pad(v, ((0, 0), (0, d_pad - D)))
        return v

    w_p = jnp.pad(w, ((0, d_pad - D), (0, d_pad - D))) if d_pad != D else w
    if matmul_dtype is not None:
        w_p = w_p.astype(matmul_dtype)  # bf16 weight: native MXU mode, half the VMEM
    bias_p = pad_vec(bias)
    gamma_p = pad_vec(gamma)
    beta_p = pad_vec(beta)

    kernel = _make_kernel(D, d_pad, eps)

    out = pl.pallas_call(
        kernel,
        out_shape=jax.ShapeDtypeStruct((rows_pad, d_pad), x.dtype),
        grid_spec=pltpu.PrefetchScalarGridSpec(
            num_scalar_prefetch=0,
            grid=(rows_pad // tile,),
            in_specs=[
                pl.BlockSpec((tile, d_pad), lambda i: (i, 0)),    # x tile
                pl.BlockSpec((d_pad, d_pad), lambda i: (0, 0)),   # W (resident)
                pl.BlockSpec((1, d_pad), lambda i: (0, 0)),       # bias
                pl.BlockSpec((1, d_pad), lambda i: (0, 0)),       # gamma (a_2)
                pl.BlockSpec((1, d_pad), lambda i: (0, 0)),       # beta  (b_2)
            ],
            out_specs=pl.BlockSpec((tile, d_pad), lambda i: (i, 0)),
        ),
        compiler_params=pltpu.CompilerParams(
            dimension_semantics=("parallel",),       # megacore sharding on v7x
            vmem_limit_bytes=64 * 1024 * 1024,       # unlock big row tiles (safe on v5e/v6e/v7x)
        ),
    )(x2, w_p, bias_p, gamma_p, beta_p)

    return out[:rows, :D].reshape(B, S, D)


def _reference(x, w, bias, gamma, beta, eps=EPS):
    sub = jnp.einsum("bsd,de->bse", x, w) + bias
    y = x + sub
    mean = jnp.mean(y, axis=-1, keepdims=True)
    var = jnp.sum((y - mean) ** 2, axis=-1, keepdims=True) / (y.shape[-1] - 1)
    std = jnp.sqrt(var)
    return gamma * (y - mean) / (std + eps) + beta


if __name__ == "__main__":
    def run_case(B, S, D, key):
        kx, kw, kb, kg, kbe = jax.random.split(key, 5)
        x = jax.random.normal(kx, (B, S, D), dtype=jnp.float32)
        w = 0.02 * jax.random.normal(kw, (D, D), dtype=jnp.float32)
        bias = 0.01 * jax.random.normal(kb, (D,), dtype=jnp.float32)
        gamma = 1.0 + 0.1 * jax.random.normal(kg, (D,), dtype=jnp.float32)
        beta = 0.1 * jax.random.normal(kbe, (D,), dtype=jnp.float32)

        out = sublayer_connection(x, w, bias, gamma, beta)
        out = jax.block_until_ready(out)

        ref = _reference(x, w, bias, gamma, beta)
        assert out.shape == (B, S, D)
        # bf16 matmul + approx reciprocal -> loose-but-safe tolerance.
        assert jnp.allclose(out, ref, atol=3e-2, rtol=3e-2), f"mismatch {B}x{S}x{D}"

    key = jax.random.PRNGKey(0)
    k1, k2 = jax.random.split(key)
    run_case(2, 8, 32, k1)     # small D: exercises lane-padding (D -> 128) path
    run_case(3, 100, 128, k2)  # grid > 1 with padded row tail; lane-dense D
    print("KERNEL_OK")
</pallas_src>

<mosaic_0001>
module attributes {stable_mosaic.version = 11 : i64} {
  func.func @kernel(%arg0: i32, %arg1: memref<16x128xf32, #tpu.memory_space<vmem>>, %arg2: memref<128x128xbf16, #tpu.memory_space<vmem>>, %arg3: memref<1x128xf32, #tpu.memory_space<vmem>>, %arg4: memref<1x128xf32, #tpu.memory_space<vmem>>, %arg5: memref<1x128xf32, #tpu.memory_space<vmem>>, %arg6: memref<16x128xf32, #tpu.memory_space<vmem>>) attributes {dimension_semantics = [#tpu.dimension_semantics<parallel>], iteration_bounds = array<i64: 1>, scalar_prefetch = 0 : i64, scratch_operands = 0 : i64, tpu.core_type = #tpu.core_type<tc>, window_params = [{transform_indices = @transform_0, window_bounds = array<i64: 16, 128>}, {pipeline_mode = #tpu.pipeline_mode<synchronous>, transform_indices = @transform_1, window_bounds = array<i64: 128, 128>}, {pipeline_mode = #tpu.pipeline_mode<synchronous>, transform_indices = @transform_2, window_bounds = array<i64: 1, 128>}, {pipeline_mode = #tpu.pipeline_mode<synchronous>, transform_indices = @transform_3, window_bounds = array<i64: 1, 128>}, {pipeline_mode = #tpu.pipeline_mode<synchronous>, transform_indices = @transform_4, window_bounds = array<i64: 1, 128>}, {transform_indices = @transform_5, window_bounds = array<i64: 16, 128>}]} {
    %c0 = arith.constant 0 : index
    %c0_0 = arith.constant 0 : index
    %0 = vector.load %arg1[%c0, %c0_0] : memref<16x128xf32, #tpu.memory_space<vmem>>, vector<16x128xf32>
    %c0_1 = arith.constant 0 : index
    %c0_2 = arith.constant 0 : index
    %1 = vector.load %arg2[%c0_1, %c0_2] : memref<128x128xbf16, #tpu.memory_space<vmem>>, vector<128x128xbf16>
    %2 = arith.truncf %0 : vector<16x128xf32> to vector<16x128xbf16>
    %cst = arith.constant dense<0.000000e+00> : vector<16x128xf32>
    %3 = tpu.matmul %2, %1, %cst {dimension_numbers = #tpu.dot_dimension_numbers<[1], [0], [0], [1], [0, 0, 1, 1], [], []>} : vector<16x128xbf16>, vector<128x128xbf16>, vector<16x128xf32> -> vector<16x128xf32>
    %c0_3 = arith.constant 0 : index
    %c0_4 = arith.constant 0 : index
    %4 = vector.load %arg3[%c0_3, %c0_4] : memref<1x128xf32, #tpu.memory_space<vmem>>, vector<1x128xf32>
    %5 = vector.broadcast %4 : vector<1x128xf32> to vector<16x128xf32>
    %6 = arith.addf %3, %5 : vector<16x128xf32>
    %7 = arith.addf %0, %6 : vector<16x128xf32>
    %cst_5 = arith.constant dense<0.000000e+00> : vector<16xf32>
    %8 = vector.multi_reduction <add>, %7, %cst_5 [1] : vector<16x128xf32> to vector<16xf32>
    %9 = vector.shape_cast %8 : vector<16xf32> to vector<16x1xf32>
    %cst_6 = arith.constant 3.125000e-02 : f32
    %10 = vector.broadcast %cst_6 : f32 to vector<16x1xf32>
    %11 = arith.mulf %9, %10 : vector<16x1xf32>
    %12 = vector.broadcast %11 : vector<16x1xf32> to vector<16x128xf32>
    %13 = arith.subf %7, %12 : vector<16x128xf32>
    %14 = tpu.iota {dimensions = array<i32: 1>} : vector<16x128xi32>
    %c32_i32 = arith.constant 32 : i32
    %15 = vector.broadcast %c32_i32 : i32 to vector<16x128xi32>
    %16 = arith.cmpi slt, %14, %15 : vector<16x128xi32>
    %cst_7 = arith.constant 0.000000e+00 : f32
    %17 = vector.broadcast %cst_7 : f32 to vector<16x128xf32>
    %18 = arith.select %16, %13, %17 : vector<16x128xi1>, vector<16x128xf32>
    %19 = arith.mulf %18, %18 : vector<16x128xf32>
    %cst_8 = arith.constant dense<0.000000e+00> : vector<16xf32>
    %20 = vector.multi_reduction <add>, %19, %cst_8 [1] : vector<16x128xf32> to vector<16xf32>
    %21 = vector.shape_cast %20 : vector<16xf32> to vector<16x1xf32>
    %cst_9 = arith.constant 0.0322580636 : f32
    %22 = vector.broadcast %cst_9 : f32 to vector<16x1xf32>
    %23 = arith.mulf %21, %22 : vector<16x1xf32>
    %24 = math.sqrt %23 : vector<16x1xf32>
    %cst_10 = arith.constant 9.99999997E-7 : f32
    %25 = vector.broadcast %cst_10 : f32 to vector<16x1xf32>
    %26 = arith.addf %24, %25 : vector<16x1xf32>
    %27 = tpu.reciprocal %26 {approx = true} : vector<16x1xf32> -> vector<16x1xf32>
    %c0_11 = arith.constant 0 : index
    %c0_12 = arith.constant 0 : index
    %28 = vector.load %arg4[%c0_11, %c0_12] : memref<1x128xf32, #tpu.memory_space<vmem>>, vector<1x128xf32>
    %29 = vector.broadcast %28 : vector<1x128xf32> to vector<16x128xf32>
    %30 = arith.mulf %29, %13 : vector<16x128xf32>
    %31 = vector.broadcast %27 : vector<16x1xf32> to vector<16x128xf32>
    %32 = arith.mulf %30, %31 : vector<16x128xf32>
    %c0_13 = arith.constant 0 : index
    %c0_14 = arith.constant 0 : index
    %33 = vector.load %arg5[%c0_13, %c0_14] : memref<1x128xf32, #tpu.memory_space<vmem>>, vector<1x128xf32>
    %34 = vector.broadcast %33 : vector<1x128xf32> to vector<16x128xf32>
    %35 = arith.addf %32, %34 : vector<16x128xf32>
    %c0_15 = arith.constant 0 : index
    %c0_16 = arith.constant 0 : index
    %36 = vector.load %arg6[%c0_15, %c0_16] : memref<16x128xf32, #tpu.memory_space<vmem>>, vector<16x128xf32>
    tpu.vector_store %arg6[%c0_15, %c0_16], %35 {strides = array<i32>} : memref<16x128xf32, #tpu.memory_space<vmem>>, vector<16x128xf32>,
    return
  }
  func.func @transform_0(%arg0: i32) -> (i32, i32) {
    %c0_i32 = arith.constant 0 : i32
    %c0_i32_0 = arith.constant 0 : i32
    return %arg0, %c0_i32 : i32, i32
  }
  func.func @transform_1(%arg0: i32) -> (i32, i32) {
    %c0_i32 = arith.constant 0 : i32
    %c0_i32_0 = arith.constant 0 : i32
    %c0_i32_1 = arith.constant 0 : i32
    return %c0_i32, %c0_i32_0 : i32, i32
  }
  func.func @transform_2(%arg0: i32) -> (i32, i32) {
    %c0_i32 = arith.constant 0 : i32
    %c0_i32_0 = arith.constant 0 : i32
    %c0_i32_1 = arith.constant 0 : i32
    return %c0_i32, %c0_i32_0 : i32, i32
  }
  func.func @transform_3(%arg0: i32) -> (i32, i32) {
    %c0_i32 = arith.constant 0 : i32
    %c0_i32_0 = arith.constant 0 : i32
    %c0_i32_1 = arith.constant 0 : i32
    return %c0_i32, %c0_i32_0 : i32, i32
  }
  func.func @transform_4(%arg0: i32) -> (i32, i32) {
    %c0_i32 = arith.constant 0 : i32
    %c0_i32_0 = arith.constant 0 : i32
    %c0_i32_1 = arith.constant 0 : i32
    return %c0_i32, %c0_i32_0 : i32, i32
  }
  func.func @transform_5(%arg0: i32) -> (i32, i32) {
    %c0_i32 = arith.constant 0 : i32
    %c0_i32_0 = arith.constant 0 : i32
    return %arg0, %c0_i32 : i32, i32
  }
}

</mosaic_0001>

<llo_original>
// kernel: tpu_custom_call.1
$region0: #{tpu_custom_call.1}
  #allocation0 [shape = 'u32[]', space=smem, size = 0x4, offset = 0x4, fixed_abs, tag = 'smem constant byte address 0x4 - core index']
  #allocation1 [shape = 'u32[144,128]{1,0:T(1,128)}', space=vmem, size = 0x12000, scoped, tag = 'internal scratch']
  %s0 = inlined_call_operand.hbm [shape: f32[16,128], index: 0, kind: input, shape index: {}]
  %s1 = inlined_call_operand.hbm [shape: bf16[128,128], index: 1, kind: input, shape index: {}]
  %s2 = inlined_call_operand.hbm [shape: f32[1,128], index: 2, kind: input, shape index: {}]
  %s3 = inlined_call_operand.hbm [shape: f32[1,128], index: 3, kind: input, shape index: {}]
  %s4 = inlined_call_operand.hbm [shape: f32[1,128], index: 4, kind: input, shape index: {}]
  %s5 = inlined_call_operand.hbm [shape: f32[16,128], index: 5, kind: output, shape index: {}]
  %s6 = sld [smem:[#allocation0]]
  $region50: #{tpu_custom_call.1} parent=0
    _
  %s8 = ssub.s32 1, %s6
  %s9 = scalar_select 0, %s8, %s6
  $region1: #{tpu_custom_call.1} parent=0
    #allocation2 [shape = 'u8[8192]{0}', space=vmem, size = 0x2000, scoped, tag = 'input window, operand 0, single buffered']
    #allocation3 [shape = 's32[1]{0}', space=sflag, size = 0x4, scoped, tag = 'scoped memory for tpu_custom_call.1']
    #allocation4 [shape = 's32[1]{0}', space=sflag, size = 0x4, scoped, tag = 'scoped memory for tpu_custom_call.1']
    #allocation5 [shape = 'u8[32768]{0}', space=vmem, size = 0x8000, scoped, tag = 'input window, operand 1, single buffered']
    #allocation6 [shape = 's32[1]{0}', space=sflag, size = 0x4, scoped, tag = 'scoped memory for tpu_custom_call.1']
    #allocation7 [shape = 'u8[512]{0}', space=vmem, size = 0x400, scoped, tag = 'input window, operand 2, single buffered']
    #allocation8 [shape = 'u8[512]{0}', space=vmem, size = 0x400, scoped, tag = 'input window, operand 3, single buffered']
    #allocation9 [shape = 's32[1]{0}', space=sflag, size = 0x4, scoped, tag = 'scoped memory for tpu_custom_call.1']
    #allocation10 [shape = 'u8[512]{0}', space=vmem, size = 0x400, scoped, tag = 'input window, operand 4, single buffered']
    #allocation11 [shape = 'u8[8192]{0}', space=vmem, size = 0x2000, scoped, tag = 'output window, operand 0, single buffered']
    %10 = vsyncpa [#allocation3], 0
    %11 = vsyncpa [#allocation6], 0
    %12 = vsyncpa [#allocation9], 0
    %13 = vsyncpa [#allocation4], 0
    // Predicated region
    $region2: #{tpu_custom_call.1} parent=1 // pred_check
      _
    $region3: #{tpu_custom_call.1} parent=1 // pred_check_branch
      %15 = sbr.rel (0) target = $region5
    $region4: #{tpu_custom_call.1} parent=1 // pred_region
      %s17 = ssub.s32 256, 256
      %18 = vsyncadd [#allocation3], %s17
      %s19 = sshll.u32 [#allocation2], 4
      %s20 = int_to_ptr.vmem [resolvable:$true] %s19
      %25 = dma.hbm_to_vmem [thread:$0]  %s0, 256, %s20, [#allocation3], 128, 128, 8
    $region5: #{tpu_custom_call.1} parent=1 // pred_fallthru
      _
    // Predicated region
    $region6: #{tpu_custom_call.1} parent=1 // pred_check
      _
    $region7: #{tpu_custom_call.1} parent=1 // pred_check_branch
      %27 = sbr.rel (0) target = $region9
    $region8: #{tpu_custom_call.1} parent=1 // pred_region
      %s29 = ssub.s32 1024, 1024
      %30 = vsyncadd [#allocation6], %s29
      %s31 = sshll.u32 [#allocation5], 4
      %s32 = int_to_ptr.vmem [resolvable:$true] %s31
      %37 = dma.hbm_to_vmem [thread:$0]  %s1, 1024, %s32, [#allocation6], 64, 64, 4
    $region9: #{tpu_custom_call.1} parent=1 // pred_fallthru
      _
    // Predicated region
    $region10: #{tpu_custom_call.1} parent=1 // pred_check
      _
    $region11: #{tpu_custom_call.1} parent=1 // pred_check_branch
      %39 = sbr.rel (0) target = $region13
    $region12: #{tpu_custom_call.1} parent=1 // pred_region
      %s41 = ssub.s32 16, 16
      %42 = vsyncadd [#allocation6], %s41
      %s44 = sshll.u32 [#allocation7], 4
      %s45 = int_to_ptr.vmem [resolvable:$true] %s44
      %47 = dma.hbm_to_vmem [thread:$0]  %s2, 16, %s45, [#allocation6]
    $region13: #{tpu_custom_call.1} parent=1 // pred_fallthru
      _
    // Predicated region
    $region14: #{tpu_custom_call.1} parent=1 // pred_check
      _
    $region15: #{tpu_custom_call.1} parent=1 // pred_check_branch
      %49 = sbr.rel (0) target = $region17
    $region16: #{tpu_custom_call.1} parent=1 // pred_region
      %s51 = ssub.s32 16, 16
      %52 = vsyncadd [#allocation9], %s51
      %s54 = sshll.u32 [#allocation8], 4
      %s55 = int_to_ptr.vmem [resolvable:$true] %s54
      %57 = dma.hbm_to_vmem [thread:$0]  %s3, 16, %s55, [#allocation9]
    $region17: #{tpu_custom_call.1} parent=1 // pred_fallthru
      _
    // Predicated region
    $region18: #{tpu_custom_call.1} parent=1 // pred_check
      _
    $region19: #{tpu_custom_call.1} parent=1 // pred_check_branch
      %59 = sbr.rel (0) target = $region21
    $region20: #{tpu_custom_call.1} parent=1 // pred_region
      %s61 = ssub.s32 16, 16
      %62 = vsyncadd [#allocation9], %s61
      %s64 = sshll.u32 [#allocation10], 4
      %s65 = int_to_ptr.vmem [resolvable:$true] %s64
      %67 = dma.hbm_to_vmem [thread:$0]  %s4, 16, %s65, [#allocation9]
    $region21: #{tpu_custom_call.1} parent=1 // pred_fallthru
      _
    // Predicated region
    $region22: #{tpu_custom_call.1} parent=1 // pred_check
      _
    $region23: #{tpu_custom_call.1} parent=1 // pred_check_branch
      %69 = sbr.rel (0) target = $region25
    $region24: #{tpu_custom_call.1} parent=1 // pred_region
      %70 = dma.done [#allocation3], 256
    $region25: #{tpu_custom_call.1} parent=1 // pred_fallthru
      _
    // Predicated region
    $region26: #{tpu_custom_call.1} parent=1 // pred_check
      _
    $region27: #{tpu_custom_call.1} parent=1 // pred_check_branch
      %72 = sbr.rel (0) target = $region29
    $region28: #{tpu_custom_call.1} parent=1 // pred_region
      %73 = dma.done [#allocation6], 1024
    $region29: #{tpu_custom_call.1} parent=1 // pred_fallthru
      _
    // Predicated region
    $region30: #{tpu_custom_call.1} parent=1 // pred_check
      _
    $region31: #{tpu_custom_call.1} parent=1 // pred_check_branch
      %75 = sbr.rel (0) target = $region33
    $region32: #{tpu_custom_call.1} parent=1 // pred_region
      %76 = dma.done [#allocation6], 16
    $region33: #{tpu_custom_call.1} parent=1 // pred_fallthru
      _
    // Predicated region
    $region34: #{tpu_custom_call.1} parent=1 // pred_check
      _
    $region35: #{tpu_custom_call.1} parent=1 // pred_check_branch
      %78 = sbr.rel (0) target = $region37
    $region36: #{tpu_custom_call.1} parent=1 // pred_region
      %79 = dma.done [#allocation9], 16
    $region37: #{tpu_custom_call.1} parent=1 // pred_fallthru
      _
    // Predicated region
    $region38: #{tpu_custom_call.1} parent=1 // pred_check
      _
    $region39: #{tpu_custom_call.1} parent=1 // pred_check_branch
      %81 = sbr.rel (0) target = $region41
    $region40: #{tpu_custom_call.1} parent=1 // pred_region
      %82 = dma.done [#allocation9], 16
    $region41: #{tpu_custom_call.1} parent=1 // pred_fallthru
      _
    %v84 = vld [vmem:[#allocation2] sm:$0xff]
    %v85 = vld [vmem:[#allocation2 + $0x8] sm:$0xff]
    %v86 = vld [vmem:[#allocation5] sm:$0xf]
    %v87 = vld [vmem:[#allocation5 + $0x4] sm:$0xf]
    %v88 = vld [vmem:[#allocation5 + $0x8] sm:$0xf]
    %v89 = vld [vmem:[#allocation5 + $0xc] sm:$0xf]
    %v90 = vld [vmem:[#allocation5 + $0x10] sm:$0xf]
    %v91 = vld [vmem:[#allocation5 + $0x14] sm:$0xf]
    %v92 = vld [vmem:[#allocation5 + $0x18] sm:$0xf]
    %v93 = vld [vmem:[#allocation5 + $0x1c] sm:$0xf]
    %v94 = vld [vmem:[#allocation5 + $0x20] sm:$0xf]
    %v95 = vld [vmem:[#allocation5 + $0x24] sm:$0xf]
    %v96 = vld [vmem:[#allocation5 + $0x28] sm:$0xf]
    %v97 = vld [vmem:[#allocation5 + $0x2c] sm:$0xf]
    %v98 = vld [vmem:[#allocation5 + $0x30] sm:$0xf]
    %v99 = vld [vmem:[#allocation5 + $0x34] sm:$0xf]
    %v100 = vld [vmem:[#allocation5 + $0x38] sm:$0xf]
    %v101 = vld [vmem:[#allocation5 + $0x3c] sm:$0xf]
    %v102 = vpack.c.bf16 %v85, %v84
    %v103 = vld [vmem:[#allocation7] sm:$0x1]
    %v105 = vlaneseq
    %v106 = vshrl.u32 %v105, 7
    %v107 = vsub.s32 0, %v106
    %v108 = vrot.slane %v103, %v107
    %v126 = vunpack.c.l.b16 %v86
    %v127 = vunpack.c.l.b16 %v87
    %v128 = vunpack.c.l.b16 %v88
    %v129 = vunpack.c.l.b16 %v89
    %v130 = vunpack.c.l.b16 %v90
    %v131 = vunpack.c.l.b16 %v91
    %v132 = vunpack.c.l.b16 %v92
    %v133 = vunpack.c.l.b16 %v93
    %v134 = vunpack.c.l.b16 %v94
    %v135 = vunpack.c.l.b16 %v95
    %v136 = vunpack.c.l.b16 %v96
    %v137 = vunpack.c.l.b16 %v97
    %v138 = vunpack.c.l.b16 %v98
    %v139 = vunpack.c.l.b16 %v99
    %v140 = vunpack.c.l.b16 %v100
    %v141 = vunpack.c.l.b16 %v101
    %v142 = vpack.c.b16 %v127, %v126
    %v143 = vpack.c.b16 %v129, %v128
    %v144 = vpack.c.b16 %v131, %v130
    %v145 = vpack.c.b16 %v133, %v132
    %v146 = vpack.c.b16 %v135, %v134
    %v147 = vpack.c.b16 %v137, %v136
    %v148 = vpack.c.b16 %v139, %v138
    %v149 = vpack.c.b16 %v141, %v140
    %158 = vmatprep.subr.bf16.mxu0 0
    %159 = vmatpush1.bf16.msra.mxu0 %v142
    %160 = vmatprep.subr.bf16.mxu0 0
    %161 = vmatpush1.bf16.msra.mxu0 %v143
    %162 = vmatprep.subr.bf16.mxu0 0
    %163 = vmatpush1.bf16.msra.mxu0 %v144
    %164 = vmatprep.subr.bf16.mxu0 0
    %165 = vmatpush1.bf16.msra.mxu0 %v145
    %166 = vmatprep.subr.bf16.mxu0 0
    %167 = vmatpush1.bf16.msra.mxu0 %v146
    %168 = vmatprep.subr.bf16.mxu0 0
    %169 = vmatpush1.bf16.msra.mxu0 %v147
    %170 = vmatprep.subr.bf16.mxu0 0
    %171 = vmatpush1.bf16.msra.mxu0 %v148
    %172 = vmatprep.subr.bf16.mxu0 0
    %173 = vmatpush1.bf16.msra.mxu0 %v149
    %174 = vmatprep.subr.bf16.mxu0 0
    %175 = vmatpush1.bf16.msra.mxu0 0
    %176 = vmatprep.subr.bf16.mxu0 0
    %177 = vmatpush1.bf16.msra.mxu0 0
    %178 = vmatprep.subr.bf16.mxu0 0
    %179 = vmatpush1.bf16.msra.mxu0 0
    %180 = vmatprep.subr.bf16.mxu0 0
    %181 = vmatpush1.bf16.msra.mxu0 0
    %182 = vmatprep.subr.bf16.mxu0 0
    %183 = vmatpush1.bf16.msra.mxu0 0
    %184 = vmatprep.subr.bf16.mxu0 0
    %185 = vmatpush1.bf16.msra.mxu0 0
    %186 = vmatprep.subr.bf16.mxu0 0
    %187 = vmatpush1.bf16.msra.mxu0 0
    %188 = vmatprep.subr.bf16.mxu0 0
    %189 = vmatpush1.bf16.msra.mxu0 0
    %190 = vmatprep.mubr.bf16.mxu0 0
    %191 = vmatmul.mubr.bf16.gmra.mrb[0].mxu0 %v102
    %v192 = vpop.f32.mrb[0].mxu0
    %v193 = vadd.f32 %v108, %v192
    %v194 = vpop.f32.mrb[0].mxu0
    %v195 = vpop.f32.mrb[0].mxu0
    %v196 = vadd.f32 %v108, %v195
    %v197 = vpop.f32.mrb[0].mxu0
    %198 = vdwg.mxu0
    %v199 = vadd.f32 %v84, %v193
    %v200 = vadd.f32 %v85, %v196
    %201 = vadd.xlane.f32.xlu0 %v199
    %v202 = vpop.xlane.xlu0 %201
    %203 = vadd.xlane.f32.xlu0 %v200
    %v204 = vpop.xlane.xlu0 %203
    %v205 = vmul.f32 %v202, 0.03125
    %v206 = vmul.f32 %v204, 0.03125
    %v207 = vsub.f32 %v199, %v205
    %v208 = vsub.f32 %v200, %v206
    %v209 = vlaneseq
    %v210 = vand.u32 %v209, 127
    %vm211 = vcmp.lt.s32.totalorder %v210, 32
    %v212 = vsel %vm211, %v207, 0.0
    %v213 = vsel %vm211, %v208, 0.0
    %v214 = vmul.f32 %v212, %v212
    %v215 = vmul.f32 %v213, %v213
    %216 = vadd.xlane.f32.xlu0 %v214
    %v217 = vpop.xlane.xlu0 %216
    %218 = vadd.xlane.f32.xlu0 %v215
    %v219 = vpop.xlane.xlu0 %218
    %v220 = vmul.f32 %v217, 0.032258064
    %v221 = vmul.f32 %v219, 0.032258064
    %v222 = vrsqrt.pop %v220
    %v223 = vmul.f32 %v220, %v222
    %vm224 = vcmp.eq.f32.partialorder %v220, inf
    %v225 = vsel %vm224, %v220, %v223
    %vm226 = vcmp.eq.f32.partialorder %v220, 0.0
    %v227 = vand.u32 %v220, 2147483648
    %v228 = vsel %vm226, %v227, %v225
    %v229 = vrsqrt.pop %v221
    %v230 = vmul.f32 %v221, %v229
    %vm231 = vcmp.eq.f32.partialorder %v221, inf
    %v232 = vsel %vm231, %v221, %v230
    %vm233 = vcmp.eq.f32.partialorder %v221, 0.0
    %v234 = vand.u32 %v221, 2147483648
    %v235 = vsel %vm233, %v234, %v232
    %v236 = vadd.f32 %v228, 1e-06
    %v237 = vadd.f32 %v235, 1e-06
    %v238 = vrcp.pop %v236
    %v239 = vrcp.pop %v237
    %v240 = vld [vmem:[#allocation8] sm:$0x1]
    %v242 = vlaneseq
    %v243 = vshrl.u32 %v242, 7
    %v244 = vsub.s32 0, %v243
    %v245 = vrot.slane %v240, %v244
    %v247 = vmul.f32 %v245, %v207
    %v248 = vmul.f32 %v245, %v208
    %v249 = vmul.f32 %v247, %v238
    %v250 = vmul.f32 %v248, %v239
    %v251 = vld [vmem:[#allocation10] sm:$0x1]
    %v253 = vlaneseq
    %v254 = vshrl.u32 %v253, 7
    %v255 = vsub.s32 0, %v254
    %v256 = vrot.slane %v251, %v255
    %v258 = vadd.f32 %v249, %v256
    %v259 = vadd.f32 %v250, %v256
    %260 = vst [vmem:[#allocation11] sm:$0xff] %v258
    %261 = vst [vmem:[#allocation11 + $0x8] sm:$0xff] %v259
    // Predicated region
    $region42: #{tpu_custom_call.1} parent=1 // pred_check
      _
    $region43: #{tpu_custom_call.1} parent=1 // pred_check_branch
      %263 = sbr.rel (0) target = $region45
    $region44: #{tpu_custom_call.1} parent=1 // pred_region
      %s265 = ssub.s32 256, 256
      %266 = vsyncadd [#allocation4], %s265
      %s267 = sshll.u32 [#allocation11], 4
      %s268 = int_to_ptr.vmem [resolvable:$true] %s267
      %273 = dma.vmem_to_hbm [thread:$0]  %s268, 256, %s5, [#allocation4], 128, 128, 8
    $region45: #{tpu_custom_call.1} parent=1 // pred_fallthru
      _
    // Predicated region
    $region46: #{tpu_custom_call.1} parent=1 // pred_check
      _
    $region47: #{tpu_custom_call.1} parent=1 // pred_check_branch
      %275 = sbr.rel (0) target = $region49
    $region48: #{tpu_custom_call.1} parent=1 // pred_region
      %276 = dma.done [#allocation4], 256
    $region49: #{tpu_custom_call.1} parent=1 // pred_fallthru
      _
    %277 = vsyncpa [#allocation3], 1
    %278 = vsyncpa [#allocation6], 1
    %279 = vsyncpa [#allocation9], 1
    %280 = vsyncpa [#allocation4], 1

</llo_original>
